<compile_context>
chip_gen: v7x
topology: tpu7x:2x2x1
jax: 0.10.0
libtpu: 0.0.40
codegen_flags: <defaults>
</compile_context>

<pallas_src>
import functools
import numpy as np

import jax
import jax.numpy as jnp
from jax.experimental import pallas as pl
from jax.experimental.pallas import tpu as pltpu

BN_EPS = 1e-5
BN_SCALE = float(1.0 / np.sqrt(1.0 + BN_EPS))  # eval-mode BN with default stats


def _round_up(x, m):
    return ((x + m - 1) // m) * m


# --------------------------------------------------------------------------- #
# Tiled linear: y = [relu](x @ w + b), bf16 operands, f32 accumulator
# --------------------------------------------------------------------------- #
def _linear_kernel(*refs, relu, nk, has_bias):
    if has_bias:
        x_ref, w_ref, b_ref, o_ref, acc_ref = refs
    else:
        x_ref, w_ref, o_ref, acc_ref = refs
        b_ref = None

    @pl.when(pl.program_id(2) == 0)
    def _init():
        acc_ref[...] = jnp.zeros_like(acc_ref)

    acc_ref[...] += jnp.dot(x_ref[...], w_ref[...],
                            preferred_element_type=jnp.float32)

    @pl.when(pl.program_id(2) == nk - 1)
    def _finalize():
        y = acc_ref[...]
        if has_bias:
            y = y + b_ref[...]
        if relu:
            y = jnp.maximum(y, 0.0)
        o_ref[...] = y


def pallas_linear(x, w, b=None, *, relu=False, tn=128, tk=512, tm=512):
    """y = [relu](x @ w + b)   (x:[N,K], w:[K,M], b:[M] or None)."""
    x = jnp.asarray(x, jnp.float32)
    w = jnp.asarray(w, jnp.float32)
    N, K = x.shape
    Kw, M = w.shape
    assert K == Kw
    tn = min(tn, _round_up(N, 8))
    tk = min(tk, _round_up(K, 128))
    tm = min(tm, _round_up(M, 128))
    Np, Kp, Mp = _round_up(N, tn), _round_up(K, tk), _round_up(M, tm)

    xp = jnp.pad(x.astype(jnp.bfloat16), ((0, Np - N), (0, Kp - K)))
    wp = jnp.pad(w.astype(jnp.bfloat16), ((0, Kp - K), (0, Mp - M)))
    nb, mb, nk = Np // tn, Mp // tm, Kp // tk

    in_specs = [pl.BlockSpec((tn, tk), lambda i, j, k: (i, k)),
                pl.BlockSpec((tk, tm), lambda i, j, k: (k, j))]
    args = [xp, wp]
    has_bias = b is not None
    if has_bias:
        bp = jnp.pad(jnp.asarray(b, jnp.float32), ((0, Mp - M),)).reshape(1, Mp)
        in_specs.append(pl.BlockSpec((1, tm), lambda i, j, k: (0, j)))
        args.append(bp)

    kern = functools.partial(_linear_kernel, relu=relu, nk=nk, has_bias=has_bias)
    out = pl.pallas_call(
        kern,
        out_shape=jax.ShapeDtypeStruct((Np, Mp), jnp.float32),
        grid=(nb, mb, nk),
        in_specs=in_specs,
        out_specs=pl.BlockSpec((tn, tm), lambda i, j, k: (i, j)),
        scratch_shapes=[pltpu.VMEM((tn, tm), jnp.float32)],
        compiler_params=pltpu.CompilerParams(
            dimension_semantics=("parallel", "parallel", "arbitrary")),
    )(*args)
    return out[:N, :M]


# --------------------------------------------------------------------------- #
# Elementwise weighted add (tiny arrays: num_graphs rows)
# --------------------------------------------------------------------------- #
def _wadd_kernel(a_ref, b_ref, o_ref, *, wa, wb):
    o_ref[...] = wa * a_ref[...] + wb * b_ref[...]


def pallas_weighted_add(a, b, wa, wb):
    a = jnp.asarray(a, jnp.float32)
    b = jnp.asarray(b, jnp.float32)
    kern = functools.partial(_wadd_kernel, wa=float(wa), wb=float(wb))
    return pl.pallas_call(
        kern,
        out_shape=jax.ShapeDtypeStruct(a.shape, jnp.float32),
        grid=(1,),
        in_specs=[pl.BlockSpec(a.shape, lambda i: (0, 0)),
                  pl.BlockSpec(b.shape, lambda i: (0, 0))],
        out_specs=pl.BlockSpec(a.shape, lambda i: (0, 0)),
    )(a, b)


# --------------------------------------------------------------------------- #
# Final head: o = (x1 * x2) @ w + b   (lane-dense padded output)
# --------------------------------------------------------------------------- #
def _mul_linear_kernel(x1_ref, x2_ref, w_ref, b_ref, o_ref):
    prod = (x1_ref[...] * x2_ref[...]).astype(jnp.bfloat16)
    o_ref[...] = (jnp.dot(prod, w_ref[...], preferred_element_type=jnp.float32)
                  + b_ref[...])


def pallas_mul_linear(x1, x2, w, b):
    x1 = jnp.asarray(x1, jnp.float32)
    x2 = jnp.asarray(x2, jnp.float32)
    n, k = x1.shape
    m = w.shape[1]
    npad = _round_up(n, 8)
    mpad = _round_up(m, 128)
    x1p = jnp.pad(x1, ((0, npad - n), (0, 0)))
    x2p = jnp.pad(x2, ((0, npad - n), (0, 0)))
    wp = jnp.pad(jnp.asarray(w, jnp.float32).astype(jnp.bfloat16),
                 ((0, 0), (0, mpad - m)))
    bp = jnp.pad(jnp.asarray(b, jnp.float32), ((0, mpad - m),)).reshape(1, mpad)
    out = pl.pallas_call(
        _mul_linear_kernel,
        out_shape=jax.ShapeDtypeStruct((npad, mpad), jnp.float32),
        grid=(1,),
        in_specs=[pl.BlockSpec((npad, k), lambda i: (0, 0)),
                  pl.BlockSpec((npad, k), lambda i: (0, 0)),
                  pl.BlockSpec((k, mpad), lambda i: (0, 0)),
                  pl.BlockSpec((1, mpad), lambda i: (0, 0))],
        out_specs=pl.BlockSpec((npad, mpad), lambda i: (0, 0)),
    )(x1p, x2p, wp, bp)
    return out[:n, :m]


# --------------------------------------------------------------------------- #
# SAG score: score = tanh(aggr @ rel_w + x @ root_w + rel_b), one launch
# --------------------------------------------------------------------------- #
def _sag_score_kernel(a_ref, x_ref, wr_ref, wx_ref, b_ref, o_ref):
    s = jnp.dot(a_ref[...], wr_ref[...], preferred_element_type=jnp.float32)
    s = s + jnp.dot(x_ref[...], wx_ref[...], preferred_element_type=jnp.float32)
    o_ref[...] = jnp.tanh(s + b_ref[...])


def pallas_sag_score(aggr, x, rel_w, rel_b, root_w):
    n, k = x.shape
    npad = _round_up(n, 8)
    ap = jnp.pad(jnp.asarray(aggr, jnp.float32), ((0, npad - n), (0, 0)))
    xp = jnp.pad(jnp.asarray(x, jnp.float32), ((0, npad - n), (0, 0)))
    out = pl.pallas_call(
        _sag_score_kernel,
        out_shape=jax.ShapeDtypeStruct((npad, 1), jnp.float32),
        grid=(1,),
        in_specs=[pl.BlockSpec((npad, k), lambda i: (0, 0)),
                  pl.BlockSpec((npad, k), lambda i: (0, 0)),
                  pl.BlockSpec((k, 1), lambda i: (0, 0)),
                  pl.BlockSpec((k, 1), lambda i: (0, 0)),
                  pl.BlockSpec((1, 1), lambda i: (0, 0))],
        out_specs=pl.BlockSpec((npad, 1), lambda i: (0, 0)),
    )(ap, xp, rel_w, root_w, rel_b.reshape(1, 1))
    return out[:n, 0]


# --------------------------------------------------------------------------- #
# Fused CFE conv chain: conv1+ReLU+MaxPool(2) -> conv2+ReLU+MaxPool(2)
# Intermediates stay in VMEM; pooling via sublane-strided reads.
# --------------------------------------------------------------------------- #
def _cfe_conv_kernel(x_ref, w1_ref, b1_ref, w2_ref, b2_ref, o_ref,
                     h1_ref, p1_ref, h2_ref, *, L, K, pad):
    L2 = L // 2
    L4 = L // 4
    x = x_ref[0]  # (L + 2*pad, Cin) f32, pre-padded along L

    # conv1 ('same' cross-correlation): per-tap MXU accumulation, bf16 operands
    acc = jnp.dot(x[0:L, :].astype(jnp.bfloat16), w1_ref[0],
                  preferred_element_type=jnp.float32)
    for k in range(1, K):
        acc = acc + jnp.dot(x[k:k + L, :].astype(jnp.bfloat16), w1_ref[k],
                            preferred_element_type=jnp.float32)
    h1_ref[...] = jnp.maximum(acc + b1_ref[...], 0.0)          # (L, C1)

    # fused MaxPool1d(2): strided sublane reads, no HBM round-trip
    pooled1 = jnp.maximum(h1_ref[pl.ds(0, L2, stride=2), :],
                          h1_ref[pl.ds(1, L2, stride=2), :])   # (L2, C1)

    # stage pooled activations (with 'same' padding rows) for conv2
    p1_ref[...] = jnp.zeros_like(p1_ref)
    p1_ref[pad:pad + L2, :] = pooled1
    p1 = p1_ref[...]                                           # (L2 + 2*pad, C1)

    acc2 = jnp.dot(p1[0:L2, :].astype(jnp.bfloat16), w2_ref[0],
                   preferred_element_type=jnp.float32)
    for k in range(1, K):
        acc2 = acc2 + jnp.dot(p1[k:k + L2, :].astype(jnp.bfloat16), w2_ref[k],
                              preferred_element_type=jnp.float32)
    h2_ref[...] = jnp.maximum(acc2 + b2_ref[...], 0.0)         # (L2, C2)

    o_ref[0] = jnp.maximum(h2_ref[pl.ds(0, L4, stride=2), :],
                           h2_ref[pl.ds(1, L4, stride=2), :])  # (L4, C2)


def pallas_cfe_conv(x, w1, b1, w2, b2):
    """x:[B,L,Cin] -> [B, L//4, Cout2] (two 'same' convs + ReLU + MaxPool2)."""
    x = jnp.asarray(x, jnp.float32)
    B, L, Cin = x.shape
    K, _, C1 = w1.shape
    _, _, C2 = w2.shape
    pad = (K - 1) // 2
    assert L % 4 == 0
    xp = jnp.pad(x, ((0, 0), (pad, pad), (0, 0)))
    kern = functools.partial(_cfe_conv_kernel, L=L, K=K, pad=pad)
    return pl.pallas_call(
        kern,
        out_shape=jax.ShapeDtypeStruct((B, L // 4, C2), jnp.float32),
        grid=(B,),
        in_specs=[
            pl.BlockSpec((1, L + 2 * pad, Cin), lambda b: (b, 0, 0)),
            pl.BlockSpec((K, Cin, C1), lambda b: (0, 0, 0)),
            pl.BlockSpec((1, C1), lambda b: (0, 0)),
            pl.BlockSpec((K, C1, C2), lambda b: (0, 0, 0)),
            pl.BlockSpec((1, C2), lambda b: (0, 0)),
        ],
        out_specs=pl.BlockSpec((1, L // 4, C2), lambda b: (b, 0, 0)),
        scratch_shapes=[
            pltpu.VMEM((L, C1), jnp.float32),
            pltpu.VMEM((L // 2 + 2 * pad, C1), jnp.float32),
            pltpu.VMEM((L // 2, C2), jnp.float32),
        ],
        compiler_params=pltpu.CompilerParams(dimension_semantics=("parallel",)),
    )(xp, jnp.asarray(w1, jnp.float32).astype(jnp.bfloat16),
      jnp.asarray(b1, jnp.float32).reshape(1, C1),
      jnp.asarray(w2, jnp.float32).astype(jnp.bfloat16),
      jnp.asarray(b2, jnp.float32).reshape(1, C2))


# --------------------------------------------------------------------------- #
# Graph glue (data-dependent -> plain JAX / host numpy)
# --------------------------------------------------------------------------- #
def gcn_conv(x, edge_index_np, w, b):
    """PyG GCNConv: D^-1/2 (A+I) D^-1/2 (X W) + b."""
    N = x.shape[0]
    src = jnp.asarray(np.asarray(edge_index_np[0], np.int32))
    dst = jnp.asarray(np.asarray(edge_index_np[1], np.int32))
    loops = jnp.arange(N, dtype=jnp.int32)
    src = jnp.concatenate([src, loops])
    dst = jnp.concatenate([dst, loops])
    deg = jax.ops.segment_sum(jnp.ones_like(dst, jnp.float32), dst, num_segments=N)
    dinv = jnp.where(deg > 0, jax.lax.rsqrt(deg), 0.0)
    norm = dinv[src] * dinv[dst]
    xw = pallas_linear(x, w)  # X @ W on MXU, no bias operand
    out = jax.ops.segment_sum(xw[src] * norm[:, None], dst, num_segments=N)
    return out + b[None, :]


def sag_pooling(x, edge_index_np, batch_np, sp, ratio=0.5):
    """PyG SAGPooling(GraphConv score, tanh, per-graph top-k, filter_adj)."""
    N = x.shape[0]
    E = edge_index_np.shape[1]
    if E > 0:
        src = jnp.asarray(np.asarray(edge_index_np[0], np.int32))
        dst = jnp.asarray(np.asarray(edge_index_np[1], np.int32))
        aggr = jax.ops.segment_sum(x[src], dst, num_segments=N)
    else:
        aggr = jnp.zeros_like(x)
    score = pallas_sag_score(aggr, x, sp["rel_w"], sp["rel_b"], sp["root_w"])

    score_np = np.asarray(score)
    batch_np = np.asarray(batch_np, np.int64)
    perm_parts = []
    for g in np.unique(batch_np):
        idx = np.where(batch_np == g)[0]
        k = int(np.ceil(ratio * idx.size))
        perm_parts.append(idx[np.argsort(-score_np[idx], kind="stable")][:k])
    perm = np.concatenate(perm_parts).astype(np.int32)

    perm_j = jnp.asarray(perm)
    x_new = x[perm_j] * score[perm_j][:, None]
    batch_new = batch_np[perm].astype(np.int32)

    remap = np.full(N, -1, np.int64)
    remap[perm] = np.arange(perm.size)
    if E > 0:
        s_np = np.asarray(edge_index_np[0], np.int64)
        d_np = np.asarray(edge_index_np[1], np.int64)
        keep = (remap[s_np] >= 0) & (remap[d_np] >= 0)
        edge_new = np.stack([remap[s_np[keep]], remap[d_np[keep]]], 0).astype(np.int32)
    else:
        edge_new = np.zeros((2, 0), np.int32)
    return x_new, edge_new, batch_new


def global_mean_pool(x, batch_np):
    num_graphs = int(np.max(batch_np)) + 1
    seg = jnp.asarray(np.asarray(batch_np, np.int32))
    sums = jax.ops.segment_sum(x, seg, num_segments=num_graphs)
    counts = jax.ops.segment_sum(jnp.ones((x.shape[0],), jnp.float32), seg,
                                 num_segments=num_graphs)
    return sums / counts[:, None]


# --------------------------------------------------------------------------- #
# Sub-modules
# --------------------------------------------------------------------------- #
def conv_feature_extractor(p, protein_vec):
    # protein_vec: [B, L, 13] (torch permutes to NCL; our kernels use [B,L,C])
    conv_out = pallas_cfe_conv(protein_vec, p["conv1_w"], p["conv1_b"],
                               p["conv2_w"], p["conv2_b"])      # [B, L//4, 128]
    B = conv_out.shape[0]
    flat = conv_out.reshape(B, -1)
    return pallas_linear(flat, p["fc_w"], p["fc_b"])            # K-tiled matmul


def gcn_forward(p, x, edge_index_np, batch_np):
    for li in range(4):
        lp = p[f"layer{li + 1}"]
        x = gcn_conv(x, edge_index_np, lp["conv_w"], lp["conv_b"])
        # fc -> relu -> BN(eval): BN scale pre-folded into fc_w/fc_b at init
        x = pallas_linear(x, lp["fc_w"], lp["fc_b"], relu=True)
        # dropout (layers 3,4) is identity in eval mode
        x, edge_index_np, batch_np = sag_pooling(x, edge_index_np, batch_np, lp["sag"])
    return global_mean_pool(x, batch_np)


def gin_forward(p, x, edge_index_np):
    N = x.shape[0]
    src = jnp.asarray(np.asarray(edge_index_np[0], np.int32))
    dst = jnp.asarray(np.asarray(edge_index_np[1], np.int32))

    def aggregate(h):
        return jax.ops.segment_sum(h[src], dst, num_segments=N)

    h = (1.0 + p["eps1"]) * x + aggregate(x)
    h = pallas_linear(h, p["mlp1_w1"], p["mlp1_b1"], relu=True)
    h = pallas_linear(h, p["mlp1_w2"], p["mlp1_b2"], relu=True)  # BN folded
    h = (1.0 + p["eps2"]) * h + aggregate(h)
    h = pallas_linear(h, p["mlp2_w1"], p["mlp2_b1"], relu=True)  # BN folded
    h = pallas_linear(h, p["lin1_w"], p["lin1_b"], relu=True)    # dropout = id
    return h


def fe_mlp(p, x):
    h = pallas_linear(x, p["w1"], p["b1"], relu=True)
    return pallas_linear(h, p["w2"], p["b2"], relu=True)         # dropout id, BN folded


# --------------------------------------------------------------------------- #
# mfc forward
# --------------------------------------------------------------------------- #
def mfc_forward(params, batch, p_x_all, p_edge_all, edge_num_index, edge_index,
                train_edge_id, protein_vec):
    batch_np = np.asarray(batch, np.int64)
    x_all = jnp.asarray(p_x_all, jnp.float32)
    edge_np = np.asarray(p_edge_all, np.int64)
    edge_num = np.asarray(edge_num_index, np.int64)
    protein_vec = jnp.asarray(protein_vec, jnp.float32)

    batch_size = 256
    num_batches = len(edge_num) // batch_size
    if len(edge_num) % batch_size != 0:
        num_batches += 1

    out_struct, out_seq = [], []
    start_edge = 0
    x_batch_all = 0
    for i in range(num_batches):
        start_idx = i * batch_size
        end_idx = min((i + 1) * batch_size, len(batch_np))
        sel = np.where((batch_np > start_idx) & (batch_np <= end_idx))[0]
        batch_b = batch_np[sel] - i * batch_size
        x_b = x_all[jnp.asarray(sel.astype(np.int32))]
        n_e = int(np.sum(edge_num[start_idx:end_idx]))
        edge_b = edge_np[:, start_edge:start_edge + n_e] - x_batch_all
        x_batch_all += sel.size
        start_edge += n_e
        out_struct.append(gcn_forward(params["SFE"], x_b, edge_b, batch_b - 1))
        out_seq.append(conv_feature_extractor(params["CFE"],
                                              protein_vec[start_idx:end_idx]))

    struct_embs = jnp.concatenate(out_struct, axis=0)
    seq_embs = jnp.concatenate(out_seq, axis=0)

    unit_embs = pallas_weighted_add(seq_embs, struct_embs,
                                    params["seq_weight"], params["stru_weight"])

    # one fe_mlp pass over stacked rows instead of two launches with same weights
    G = seq_embs.shape[0]
    fe_out = fe_mlp(params["fe_mlp"], jnp.concatenate([seq_embs, struct_embs], 0))
    seq_m, str_m = fe_out[:G], fe_out[G:]
    mlp_feature = jnp.concatenate(
        [params["seq_weight"] * seq_m, params["stru_weight"] * str_m], axis=1)

    graph_feature = gin_forward(params["PFE"], unit_embs, edge_index)
    feature = pallas_weighted_add(mlp_feature, graph_feature,
                                  params["mlp_weight"], params["ppi_weight"])

    node_id = np.asarray(edge_index, np.int64)[:, np.asarray(train_edge_id, np.int64)]
    x1 = feature[jnp.asarray(node_id[0].astype(np.int32))]
    x2 = feature[jnp.asarray(node_id[1].astype(np.int32))]
    return pallas_mul_linear(x1, x2, params["fc_w"], params["fc_b"])


# --------------------------------------------------------------------------- #
# Deterministic parameter init (BN scale folded into preceding Linear layers)
# --------------------------------------------------------------------------- #
def init_params(seq_len, key):
    keys = iter(jax.random.split(key, 64))

    def w(*shape, scale=0.1):
        return scale * jax.random.normal(next(keys), shape, jnp.float32)

    hidden, gin_hidden = 128, 512
    p = {}
    p["CFE"] = dict(
        conv1_w=w(5, 13, 64), conv1_b=w(64),
        conv2_w=w(5, 64, 128), conv2_b=w(128),
        fc_w=w(128 * (seq_len // 4), 128), fc_b=w(128),
    )
    sfe = {}
    in_dims = [7, 128, 128, 128]
    for li in range(4):
        sfe[f"layer{li + 1}"] = dict(
            conv_w=w(in_dims[li], hidden), conv_b=w(hidden),
            fc_w=w(hidden, hidden), fc_b=w(hidden),
            sag=dict(root_w=w(hidden, 1), rel_w=w(hidden, 1), rel_b=w(1)),
        )
    p["SFE"] = sfe
    p["PFE"] = dict(
        eps1=0.0, eps2=0.0,
        mlp1_w1=w(128, gin_hidden), mlp1_b1=w(gin_hidden),
        mlp1_w2=w(gin_hidden, gin_hidden), mlp1_b2=w(gin_hidden),
        mlp2_w1=w(gin_hidden, gin_hidden), mlp2_b1=w(gin_hidden),
        lin1_w=w(gin_hidden, gin_hidden), lin1_b=w(gin_hidden),
    )
    p["fe_mlp"] = dict(w1=w(128, 256), b1=w(256), w2=w(256, 256), b2=w(256))
    p["fc_w"] = w(512, 7)
    p["fc_b"] = w(7)
    p["seq_weight"] = 1.0
    p["stru_weight"] = 0.6
    p["ppi_weight"] = 1.0
    p["mlp_weight"] = 0.5

    # Fold eval-mode BatchNorm1d (default running stats) into the preceding
    # Linear: BN(relu(xW+b)) == relu(x(W*s) + b*s) for s = 1/sqrt(1+eps) > 0.
    # TODO(synk): real checkpoint BN stats would need per-feature scale/shift.
    for li in range(4):
        lp = p["SFE"][f"layer{li + 1}"]
        lp["fc_w"] = lp["fc_w"] * BN_SCALE
        lp["fc_b"] = lp["fc_b"] * BN_SCALE
    for wname, bname in (("mlp1_w2", "mlp1_b2"), ("mlp2_w1", "mlp2_b1")):
        p["PFE"][wname] = p["PFE"][wname] * BN_SCALE
        p["PFE"][bname] = p["PFE"][bname] * BN_SCALE
    p["fe_mlp"]["w2"] = p["fe_mlp"]["w2"] * BN_SCALE
    p["fe_mlp"]["b2"] = p["fe_mlp"]["b2"] * BN_SCALE
    return p


# --------------------------------------------------------------------------- #
if __name__ == "__main__":
    key = jax.random.PRNGKey(0)
    k_x, k_seq, k_par = jax.random.split(key, 3)

    SEQ_LEN = 16          # small stand-in for the hard-coded 2000 (must be %4==0)
    nodes_per_graph = [9, 12, 10, 11, 8, 10]
    num_graphs = len(nodes_per_graph)
    total_nodes = sum(nodes_per_graph)

    # per-node graph id, 1-based (as the torch forward expects)
    batch = np.concatenate(
        [np.full(n, g + 1, np.int64) for g, n in enumerate(nodes_per_graph)])

    p_x_all = jax.random.normal(k_x, (total_nodes, 7), jnp.float32)

    # bidirectional chain edges per structure graph, global node indexing
    edges, edge_counts, off = [], [], 0
    for n in nodes_per_graph:
        cnt = 0
        for i in range(n - 1):
            edges.append((off + i, off + i + 1))
            edges.append((off + i + 1, off + i))
            cnt += 2
        edge_counts.append(cnt)
        off += n
    p_edge_all = np.array(edges, np.int64).T            # [2, E_struct]
    edge_num_index = np.array(edge_counts, np.int64)    # [num_graphs]

    protein_vec = jax.random.normal(k_seq, (num_graphs, SEQ_LEN, 13), jnp.float32)

    # PPI graph over the 6 proteins
    ppi_edge_index = np.array(
        [[0, 1], [1, 0], [1, 2], [2, 1], [2, 3], [3, 2],
         [3, 4], [4, 3], [4, 5], [5, 4], [0, 3], [3, 0]], np.int64).T
    train_edge_id = np.array([0, 2, 4, 6, 8, 10], np.int64)

    params = init_params(SEQ_LEN, k_par)

    out = mfc_forward(params, batch, p_x_all, p_edge_all, edge_num_index,
                      ppi_edge_index, train_edge_id, protein_vec)
    out = jax.block_until_ready(out)

    assert out.shape == (train_edge_id.size, 7), out.shape
    assert bool(jnp.all(jnp.isfinite(out)))
    print("KERNEL_OK")
</pallas_src>

<mosaic_0001>
module attributes {stable_mosaic.version = 11 : i64} {
  func.func @_linear_kernel(%arg0: i32, %arg1: i32, %arg2: i32, %arg3: memref<64x128xbf16, #tpu.memory_space<vmem>>, %arg4: memref<128x128xbf16, #tpu.memory_space<vmem>>, %arg5: memref<64x128xf32, #tpu.memory_space<vmem>>, %arg6: memref<64x128xf32, #tpu.memory_space<vmem>>) attributes {dimension_semantics = [#tpu.dimension_semantics<parallel>, #tpu.dimension_semantics<parallel>, #tpu.dimension_semantics<arbitrary>], iteration_bounds = array<i64: 1, 1, 1>, scalar_prefetch = 0 : i64, scratch_operands = 1 : i64, tpu.core_type = #tpu.core_type<tc>, window_params = [{transform_indices = @transform_0, window_bounds = array<i64: 64, 128>}, {transform_indices = @transform_1, window_bounds = array<i64: 128, 128>}, {transform_indices = @transform_2, window_bounds = array<i64: 64, 128>}]} {
    %c0_i32 = arith.constant 0 : i32
    %0 = arith.cmpi eq, %arg2, %c0_i32 : i32
    %1 = arith.extui %0 : i1 to i32
    %c0_i32_0 = arith.constant 0 : i32
    %2 = arith.cmpi ne, %1, %c0_i32_0 : i32
    scf.if %2 {
      %cst_10 = arith.constant 0.000000e+00 : f32
      %12 = vector.broadcast %cst_10 : f32 to vector<64x128xf32>
      %c0_11 = arith.constant 0 : index
      %c0_12 = arith.constant 0 : index
      %13 = vector.load %arg6[%c0_11, %c0_12] : memref<64x128xf32, #tpu.memory_space<vmem>>, vector<64x128xf32>
      tpu.vector_store %arg6[%c0_11, %c0_12], %12 {strides = array<i32>} : memref<64x128xf32, #tpu.memory_space<vmem>>, vector<64x128xf32>,
    } else {
    }
    %c0 = arith.constant 0 : index
    %c0_1 = arith.constant 0 : index
    %3 = vector.load %arg6[%c0, %c0_1] : memref<64x128xf32, #tpu.memory_space<vmem>>, vector<64x128xf32>
    %c0_2 = arith.constant 0 : index
    %c0_3 = arith.constant 0 : index
    %4 = vector.load %arg3[%c0_2, %c0_3] : memref<64x128xbf16, #tpu.memory_space<vmem>>, vector<64x128xbf16>
    %c0_4 = arith.constant 0 : index
    %c0_5 = arith.constant 0 : index
    %5 = vector.load %arg4[%c0_4, %c0_5] : memref<128x128xbf16, #tpu.memory_space<vmem>>, vector<128x128xbf16>
    %cst = arith.constant dense<0.000000e+00> : vector<64x128xf32>
    %6 = tpu.matmul %4, %5, %cst {dimension_numbers = #tpu.dot_dimension_numbers<[1], [0], [0], [1], [0, 0, 1, 1], [], []>} : vector<64x128xbf16>, vector<128x128xbf16>, vector<64x128xf32> -> vector<64x128xf32>
    %7 = arith.addf %3, %6 : vector<64x128xf32>
    %c0_6 = arith.constant 0 : index
    %c0_7 = arith.constant 0 : index
    %8 = vector.load %arg6[%c0_6, %c0_7] : memref<64x128xf32, #tpu.memory_space<vmem>>, vector<64x128xf32>
    tpu.vector_store %arg6[%c0_6, %c0_7], %7 {strides = array<i32>} : memref<64x128xf32, #tpu.memory_space<vmem>>, vector<64x128xf32>,
    %c0_i32_8 = arith.constant 0 : i32
    %9 = arith.cmpi eq, %arg2, %c0_i32_8 : i32
    %10 = arith.extui %9 : i1 to i32
    %c0_i32_9 = arith.constant 0 : i32
    %11 = arith.cmpi ne, %10, %c0_i32_9 : i32
    scf.if %11 {
      %c0_10 = arith.constant 0 : index
      %c0_11 = arith.constant 0 : index
      %12 = vector.load %arg6[%c0_10, %c0_11] : memref<64x128xf32, #tpu.memory_space<vmem>>, vector<64x128xf32>
      %c0_12 = arith.constant 0 : index
      %c0_13 = arith.constant 0 : index
      %13 = vector.load %arg5[%c0_12, %c0_13] : memref<64x128xf32, #tpu.memory_space<vmem>>, vector<64x128xf32>
      tpu.vector_store %arg5[%c0_12, %c0_13], %12 {strides = array<i32>} : memref<64x128xf32, #tpu.memory_space<vmem>>, vector<64x128xf32>,
    } else {
    }
    return
  }
  func.func @transform_0(%arg0: i32, %arg1: i32, %arg2: i32) -> (i32, i32) {
    %c0_i32 = arith.constant 0 : i32
    return %arg0, %arg2 : i32, i32
  }
  func.func @transform_1(%arg0: i32, %arg1: i32, %arg2: i32) -> (i32, i32) {
    %c0_i32 = arith.constant 0 : i32
    return %arg2, %arg1 : i32, i32
  }
  func.func @transform_2(%arg0: i32, %arg1: i32, %arg2: i32) -> (i32, i32) {
    %c0_i32 = arith.constant 0 : i32
    return %arg0, %arg1 : i32, i32
  }
}

</mosaic_0001>

<llo_original>
// kernel: tpu_custom_call.1
$region0: #{tpu_custom_call.1}
  #allocation0 [shape = 'u32[]', space=smem, size = 0x4, offset = 0x4, fixed_abs, tag = 'smem constant byte address 0x4 - core index']
  #allocation1 [shape = 'u32[144,128]{1,0:T(1,128)}', space=vmem, size = 0x12000, scoped, tag = 'internal scratch']
  #allocation2 [shape = 'f32[64,128]{1,0:T(8,128)}', space=vmem, size = 0x8000, scoped, tag = 'scratch operand']
  %s0 = inlined_call_operand.hbm [shape: bf16[64,128], index: 0, kind: input, shape index: {}]
  %s1 = inlined_call_operand.hbm [shape: bf16[128,128], index: 1, kind: input, shape index: {}]
  %s2 = inlined_call_operand.hbm [shape: f32[64,128], index: 2, kind: output, shape index: {}]
  %s3 = sld [smem:[#allocation0]]
  $region34: #{tpu_custom_call.1} parent=0
    _
  %s5 = ssub.s32 1, %s3
  %s6 = scalar_select 0, %s5, %s3
  $region1: #{tpu_custom_call.1} parent=0
    #allocation3 [shape = 'u8[16384]{0}', space=vmem, size = 0x4000, scoped, tag = 'input window, operand 0, single buffered']
    #allocation4 [shape = 's32[1]{0}', space=sflag, size = 0x4, scoped, tag = 'scoped memory for tpu_custom_call.1']
    #allocation5 [shape = 's32[1]{0}', space=sflag, size = 0x4, scoped, tag = 'scoped memory for tpu_custom_call.1']
    #allocation6 [shape = 'u8[32768]{0}', space=vmem, size = 0x8000, scoped, tag = 'input window, operand 1, single buffered']
    #allocation7 [shape = 's32[1]{0}', space=sflag, size = 0x4, scoped, tag = 'scoped memory for tpu_custom_call.1']
    #allocation8 [shape = 'u8[32768]{0}', space=vmem, size = 0x8000, scoped, tag = 'output window, operand 0, single buffered']
    %7 = vsyncpa [#allocation4], 0
    %8 = vsyncpa [#allocation7], 0
    %9 = vsyncpa [#allocation5], 0
    // Predicated region
    $region2: #{tpu_custom_call.1} parent=1 // pred_check
      _
    $region3: #{tpu_custom_call.1} parent=1 // pred_check_branch
      %11 = sbr.rel (0) target = $region5
    $region4: #{tpu_custom_call.1} parent=1 // pred_region
      %s13 = ssub.s32 512, 512
      %14 = vsyncadd [#allocation4], %s13
      %s15 = sshll.u32 [#allocation3], 4
      %s16 = int_to_ptr.vmem [resolvable:$true] %s15
      %21 = dma.hbm_to_vmem [thread:$0]  %s0, 512, %s16, [#allocation4], 64, 64, 4
    $region5: #{tpu_custom_call.1} parent=1 // pred_fallthru
      _
    // Predicated region
    $region6: #{tpu_custom_call.1} parent=1 // pred_check
      _
    $region7: #{tpu_custom_call.1} parent=1 // pred_check_branch
      %23 = sbr.rel (0) target = $region9
    $region8: #{tpu_custom_call.1} parent=1 // pred_region
      %s25 = ssub.s32 1024, 1024
      %26 = vsyncadd [#allocation7], %s25
      %s27 = sshll.u32 [#allocation6], 4
      %s28 = int_to_ptr.vmem [resolvable:$true] %s27
      %33 = dma.hbm_to_vmem [thread:$0]  %s1, 1024, %s28, [#allocation7], 64, 64, 4
    $region9: #{tpu_custom_call.1} parent=1 // pred_fallthru
      _
    // Predicated region
    $region10: #{tpu_custom_call.1} parent=1 // pred_check
      _
    $region11: #{tpu_custom_call.1} parent=1 // pred_check_branch
      %35 = sbr.rel (0) target = $region13
    $region12: #{tpu_custom_call.1} parent=1 // pred_region
      %36 = dma.done [#allocation4], 512
    $region13: #{tpu_custom_call.1} parent=1 // pred_fallthru
      _
    // Predicated region
    $region14: #{tpu_custom_call.1} parent=1 // pred_check
      _
    $region15: #{tpu_custom_call.1} parent=1 // pred_check_branch
      %38 = sbr.rel (0) target = $region17
    $region16: #{tpu_custom_call.1} parent=1 // pred_region
      %39 = dma.done [#allocation7], 1024
    $region17: #{tpu_custom_call.1} parent=1 // pred_fallthru
      _
    %p41 = scmp.eq.s32.totalorder 0, 0
    // Predicated region
    $region18: #{tpu_custom_call.1} parent=1 // pred_check
      %p42 = pneg %p41
    $region19: #{tpu_custom_call.1} parent=1 // pred_check_branch
      %44 = sbr.rel (%p42) target = $region21
    $region20: #{tpu_custom_call.1} parent=1 // pred_region
      %45 = vst [vmem:[#allocation2] sm:$0xff] 0.0
      %46 = vst [vmem:[#allocation2 + $0x8] sm:$0xff] 0.0
      %47 = vst [vmem:[#allocation2 + $0x10] sm:$0xff] 0.0
      %48 = vst [vmem:[#allocation2 + $0x18] sm:$0xff] 0.0
      %49 = vst [vmem:[#allocation2 + $0x20] sm:$0xff] 0.0
      %50 = vst [vmem:[#allocation2 + $0x28] sm:$0xff] 0.0
      %51 = vst [vmem:[#allocation2 + $0x30] sm:$0xff] 0.0
      %52 = vst [vmem:[#allocation2 + $0x38] sm:$0xff] 0.0
    $region21: #{tpu_custom_call.1} parent=1 // pred_fallthru
      _
    %v53 = vld [vmem:[#allocation2] sm:$0xff]
    %v54 = vld [vmem:[#allocation2 + $0x8] sm:$0xff]
    %v55 = vld [vmem:[#allocation2 + $0x10] sm:$0xff]
    %v56 = vld [vmem:[#allocation2 + $0x18] sm:$0xff]
    %v57 = vld [vmem:[#allocation2 + $0x20] sm:$0xff]
    %v58 = vld [vmem:[#allocation2 + $0x28] sm:$0xff]
    %v59 = vld [vmem:[#allocation2 + $0x30] sm:$0xff]
    %v60 = vld [vmem:[#allocation2 + $0x38] sm:$0xff]
    %v61 = vld [vmem:[#allocation3] sm:$0xf]
    %v62 = vld [vmem:[#allocation3 + $0x4] sm:$0xf]
    %v63 = vld [vmem:[#allocation3 + $0x8] sm:$0xf]
    %v64 = vld [vmem:[#allocation3 + $0xc] sm:$0xf]
    %v65 = vld [vmem:[#allocation3 + $0x10] sm:$0xf]
    %v66 = vld [vmem:[#allocation3 + $0x14] sm:$0xf]
    %v67 = vld [vmem:[#allocation3 + $0x18] sm:$0xf]
    %v68 = vld [vmem:[#allocation3 + $0x1c] sm:$0xf]
    %v69 = vld [vmem:[#allocation6] sm:$0xf]
    %v70 = vld [vmem:[#allocation6 + $0x4] sm:$0xf]
    %v71 = vld [vmem:[#allocation6 + $0x8] sm:$0xf]
    %v72 = vld [vmem:[#allocation6 + $0xc] sm:$0xf]
    %v73 = vld [vmem:[#allocation6 + $0x10] sm:$0xf]
    %v74 = vld [vmem:[#allocation6 + $0x14] sm:$0xf]
    %v75 = vld [vmem:[#allocation6 + $0x18] sm:$0xf]
    %v76 = vld [vmem:[#allocation6 + $0x1c] sm:$0xf]
    %v77 = vld [vmem:[#allocation6 + $0x20] sm:$0xf]
    %v78 = vld [vmem:[#allocation6 + $0x24] sm:$0xf]
    %v79 = vld [vmem:[#allocation6 + $0x28] sm:$0xf]
    %v80 = vld [vmem:[#allocation6 + $0x2c] sm:$0xf]
    %v81 = vld [vmem:[#allocation6 + $0x30] sm:$0xf]
    %v82 = vld [vmem:[#allocation6 + $0x34] sm:$0xf]
    %v83 = vld [vmem:[#allocation6 + $0x38] sm:$0xf]
    %v84 = vld [vmem:[#allocation6 + $0x3c] sm:$0xf]
    %v93 = vunpack.c.l.b16 %v61
    %v94 = vunpack.c.l.b16 %v62
    %v95 = vunpack.c.l.b16 %v63
    %v96 = vunpack.c.l.b16 %v64
    %v97 = vunpack.c.l.b16 %v65
    %v98 = vunpack.c.l.b16 %v66
    %v99 = vunpack.c.l.b16 %v67
    %v100 = vunpack.c.l.b16 %v68
    %v101 = vpack.c.b16 %v94, %v93
    %v102 = vpack.c.b16 %v96, %v95
    %v103 = vpack.c.b16 %v98, %v97
    %v104 = vpack.c.b16 %v100, %v99
    %v125 = vunpack.c.l.b16 %v69
    %v126 = vunpack.c.l.b16 %v70
    %v127 = vunpack.c.l.b16 %v71
    %v128 = vunpack.c.l.b16 %v72
    %v129 = vunpack.c.l.b16 %v73
    %v130 = vunpack.c.l.b16 %v74
    %v131 = vunpack.c.l.b16 %v75
    %v132 = vunpack.c.l.b16 %v76
    %v133 = vunpack.c.l.b16 %v77
    %v134 = vunpack.c.l.b16 %v78
    %v135 = vunpack.c.l.b16 %v79
    %v136 = vunpack.c.l.b16 %v80
    %v137 = vunpack.c.l.b16 %v81
    %v138 = vunpack.c.l.b16 %v82
    %v139 = vunpack.c.l.b16 %v83
    %v140 = vunpack.c.l.b16 %v84
    %v141 = vpack.c.b16 %v126, %v125
    %v142 = vpack.c.b16 %v128, %v127
    %v143 = vpack.c.b16 %v130, %v129
    %v144 = vpack.c.b16 %v132, %v131
    %v145 = vpack.c.b16 %v134, %v133
    %v146 = vpack.c.b16 %v136, %v135
    %v147 = vpack.c.b16 %v138, %v137
    %v148 = vpack.c.b16 %v140, %v139
    %157 = vmatprep.subr.bf16.mxu0 0
    %158 = vmatpush1.bf16.msra.mxu0 %v141
    %159 = vmatprep.subr.bf16.mxu0 0
    %160 = vmatpush1.bf16.msra.mxu0 %v142
    %161 = vmatprep.subr.bf16.mxu0 0
    %162 = vmatpush1.bf16.msra.mxu0 %v143
    %163 = vmatprep.subr.bf16.mxu0 0
    %164 = vmatpush1.bf16.msra.mxu0 %v144
    %165 = vmatprep.subr.bf16.mxu0 0
    %166 = vmatpush1.bf16.msra.mxu0 %v145
    %167 = vmatprep.subr.bf16.mxu0 0
    %168 = vmatpush1.bf16.msra.mxu0 %v146
    %169 = vmatprep.subr.bf16.mxu0 0
    %170 = vmatpush1.bf16.msra.mxu0 %v147
    %171 = vmatprep.subr.bf16.mxu0 0
    %172 = vmatpush1.bf16.msra.mxu0 %v148
    %173 = vmatprep.subr.bf16.mxu0 0
    %174 = vmatpush1.bf16.msra.mxu0 0
    %175 = vmatprep.subr.bf16.mxu0 0
    %176 = vmatpush1.bf16.msra.mxu0 0
    %177 = vmatprep.subr.bf16.mxu0 0
    %178 = vmatpush1.bf16.msra.mxu0 0
    %179 = vmatprep.subr.bf16.mxu0 0
    %180 = vmatpush1.bf16.msra.mxu0 0
    %181 = vmatprep.subr.bf16.mxu0 0
    %182 = vmatpush1.bf16.msra.mxu0 0
    %183 = vmatprep.subr.bf16.mxu0 0
    %184 = vmatpush1.bf16.msra.mxu0 0
    %185 = vmatprep.subr.bf16.mxu0 0
    %186 = vmatpush1.bf16.msra.mxu0 0
    %187 = vmatprep.subr.bf16.mxu0 0
    %188 = vmatpush1.bf16.msra.mxu0 0
    %189 = vmatprep.mubr.bf16.mxu0 0
    %190 = vmatmul.mubr.bf16.gmra.mrb[0].mxu0 %v101
    %v191 = vpop.f32.mrb[0].mxu0
    %v192 = vadd.f32 0.0, %v191
    %v193 = vpop.f32.mrb[0].mxu0
    %v194 = vpop.f32.mrb[0].mxu0
    %v195 = vadd.f32 0.0, %v194
    %v196 = vpop.f32.mrb[0].mxu0
    %197 = vmatprep.mubr.bf16.mxu0 0
    %198 = vmatmul.mubr.bf16.gmra.mrb[0].mxu0 %v102
    %v199 = vpop.f32.mrb[0].mxu0
    %v200 = vadd.f32 0.0, %v199
    %v201 = vpop.f32.mrb[0].mxu0
    %v202 = vpop.f32.mrb[0].mxu0
    %v203 = vadd.f32 0.0, %v202
    %v204 = vpop.f32.mrb[0].mxu0
    %205 = vmatprep.mubr.bf16.mxu0 0
    %206 = vmatmul.mubr.bf16.gmra.mrb[0].mxu0 %v103
    %v207 = vpop.f32.mrb[0].mxu0
    %v208 = vadd.f32 0.0, %v207
    %v209 = vpop.f32.mrb[0].mxu0
    %v210 = vpop.f32.mrb[0].mxu0
    %v211 = vadd.f32 0.0, %v210
    %v212 = vpop.f32.mrb[0].mxu0
    %213 = vmatprep.mubr.bf16.mxu0 0
    %214 = vmatmul.mubr.bf16.gmra.mrb[0].mxu0 %v104
    %v215 = vpop.f32.mrb[0].mxu0
    %v216 = vadd.f32 0.0, %v215
    %v217 = vpop.f32.mrb[0].mxu0
    %v218 = vpop.f32.mrb[0].mxu0
    %v219 = vadd.f32 0.0, %v218
    %v220 = vpop.f32.mrb[0].mxu0
    %221 = vdwg.mxu0
    %v222 = vadd.f32 %v53, %v192
    %v223 = vadd.f32 %v54, %v195
    %v224 = vadd.f32 %v55, %v200
    %v225 = vadd.f32 %v56, %v203
    %v226 = vadd.f32 %v57, %v208
    %v227 = vadd.f32 %v58, %v211
    %v228 = vadd.f32 %v59, %v216
    %v229 = vadd.f32 %v60, %v219
    %230 = vst [vmem:[#allocation2] sm:$0xff] %v222
    %231 = vst [vmem:[#allocation2 + $0x8] sm:$0xff] %v223
    %232 = vst [vmem:[#allocation2 + $0x10] sm:$0xff] %v224
    %233 = vst [vmem:[#allocation2 + $0x18] sm:$0xff] %v225
    %234 = vst [vmem:[#allocation2 + $0x20] sm:$0xff] %v226
    %235 = vst [vmem:[#allocation2 + $0x28] sm:$0xff] %v227
    %236 = vst [vmem:[#allocation2 + $0x30] sm:$0xff] %v228
    %237 = vst [vmem:[#allocation2 + $0x38] sm:$0xff] %v229
    // Predicated region
    $region22: #{tpu_custom_call.1} parent=1 // pred_check
      %p238 = pneg %p41
    $region23: #{tpu_custom_call.1} parent=1 // pred_check_branch
      %240 = sbr.rel (%p238) target = $region25
    $region24: #{tpu_custom_call.1} parent=1 // pred_region
      %v241 = vld [vmem:[#allocation2] sm:$0xff]
      %v242 = vld [vmem:[#allocation2 + $0x8] sm:$0xff]
      %v243 = vld [vmem:[#allocation2 + $0x10] sm:$0xff]
      %v244 = vld [vmem:[#allocation2 + $0x18] sm:$0xff]
      %v245 = vld [vmem:[#allocation2 + $0x20] sm:$0xff]
      %v246 = vld [vmem:[#allocation2 + $0x28] sm:$0xff]
      %v247 = vld [vmem:[#allocation2 + $0x30] sm:$0xff]
      %v248 = vld [vmem:[#allocation2 + $0x38] sm:$0xff]
      %249 = vst [vmem:[#allocation8] sm:$0xff] %v241
      %250 = vst [vmem:[#allocation8 + $0x8] sm:$0xff] %v242
      %251 = vst [vmem:[#allocation8 + $0x10] sm:$0xff] %v243
      %252 = vst [vmem:[#allocation8 + $0x18] sm:$0xff] %v244
      %253 = vst [vmem:[#allocation8 + $0x20] sm:$0xff] %v245
      %254 = vst [vmem:[#allocation8 + $0x28] sm:$0xff] %v246
      %255 = vst [vmem:[#allocation8 + $0x30] sm:$0xff] %v247
      %256 = vst [vmem:[#allocation8 + $0x38] sm:$0xff] %v248
    $region25: #{tpu_custom_call.1} parent=1 // pred_fallthru
      _
    // Predicated region
    $region26: #{tpu_custom_call.1} parent=1 // pred_check
      _
    $region27: #{tpu_custom_call.1} parent=1 // pred_check_branch
      %258 = sbr.rel (0) target = $region29
    $region28: #{tpu_custom_call.1} parent=1 // pred_region
      %s260 = ssub.s32 1024, 1024
      %261 = vsyncadd [#allocation5], %s260
      %s262 = sshll.u32 [#allocation8], 4
      %s263 = int_to_ptr.vmem [resolvable:$true] %s262
      %268 = dma.vmem_to_hbm [thread:$0]  %s263, 1024, %s2, [#allocation5], 128, 128, 8
    $region29: #{tpu_custom_call.1} parent=1 // pred_fallthru
      _
    // Predicated region
    $region30: #{tpu_custom_call.1} parent=1 // pred_check
      _
    $region31: #{tpu_custom_call.1} parent=1 // pred_check_branch
      %270 = sbr.rel (0) target = $region33
    $region32: #{tpu_custom_call.1} parent=1 // pred_region
      %271 = dma.done [#allocation5], 1024
    $region33: #{tpu_custom_call.1} parent=1 // pred_fallthru
      _
    %272 = vsyncpa [#allocation4], 1
    %273 = vsyncpa [#allocation7], 1
    %274 = vsyncpa [#allocation5], 1

</llo_original>
